<compile_context>
chip_gen: v7x
topology: tpu7x:2x2x1
jax: 0.10.0
libtpu: 0.0.40
codegen_flags: <defaults>
</compile_context>

<pallas_src>
import jax
import jax.numpy as jnp
from jax.experimental import pallas as pl
from jax.experimental.pallas import tpu as pltpu


def _round_up(a, b):
    return (a + b - 1) // b * b


def _cdiv(a, b):
    return (a + b - 1) // b


def res_linear_block_kernel(x_ref, w1_ref, t1_ref, w2_ref, t2_ref, o_ref):
    # Keep an f32 copy of x for the residual; matmul inputs use the weights'
    # dtype (bf16 by default) with f32 accumulation on the MXU.
    x_f32 = x_ref[...].astype(jnp.float32)
    mm_dtype = w1_ref.dtype

    # Layer 1: Linear + eval-mode BatchNorm folded into (W1', t1'), then ReLU.
    h = jnp.dot(x_ref[...].astype(mm_dtype), w1_ref[...],
                preferred_element_type=jnp.float32)
    h = jnp.maximum(h + t1_ref[...], 0.0)

    # Dropout: identity in eval mode.
    # TODO(synk): training-mode dropout (pltpu.prng_random_bits mask) and
    # batch-statistics BatchNorm are not implemented (eval-mode semantics).

    # Layer 2: Linear + eval-mode BatchNorm folded into (W2', t2').
    h = jnp.dot(h.astype(mm_dtype), w2_ref[...],
                preferred_element_type=jnp.float32)
    h = h + t2_ref[...]

    # Residual add + ReLU (f32), cast to output dtype on store.
    o_ref[...] = jnp.maximum(h + x_f32, 0.0).astype(o_ref.dtype)


def res_linear_block(x, w1, t1, w2, t2, *, tile_n=256):
    """Fused ResLinearBlock forward.

    x       : (N, F) activations (f32).
    w1, w2  : (F_in, F_out) BN-folded weights (bf16 recommended); note this is
              the TRANSPOSE of PyTorch's Linear.weight layout.
    t1, t2  : (F,) BN-folded shifts (f32).
    """
    N, F = x.shape
    t1 = t1.reshape(1, -1).astype(jnp.float32)
    t2 = t2.reshape(1, -1).astype(jnp.float32)

    # Lane-dense feature dim: pad F to a multiple of 128. Zero padding is
    # inert: padded lanes stay exactly 0 through both layers and the residual.
    F_pad = _round_up(F, 128)

    # Row tile: as large as the batch allows (fills the MXU M-dim and
    # amortizes the ~0.35us/step overhead), but keep >=2 grid steps for big
    # batches so the "parallel" axis can shard across v7x's 2 TensorCores.
    tn = max(8, min(tile_n, _round_up(N, 8)))
    tn = _round_up(tn, 8)
    while tn > 128 and _cdiv(N, tn) < 2:
        tn //= 2
    N_pad = _round_up(N, tn)

    if F_pad != F or N_pad != N:
        x = jnp.pad(x, ((0, N_pad - N), (0, F_pad - F)))
        w1 = jnp.pad(w1, ((0, F_pad - F), (0, F_pad - F)))
        w2 = jnp.pad(w2, ((0, F_pad - F), (0, F_pad - F)))
        t1 = jnp.pad(t1, ((0, 0), (0, F_pad - F)))
        t2 = jnp.pad(t2, ((0, 0), (0, F_pad - F)))

    grid = (N_pad // tn,)

    row_spec = pl.BlockSpec((tn, F_pad), lambda i: (i, 0))      # x / out tiles
    mat_spec = pl.BlockSpec((F_pad, F_pad), lambda i: (0, 0))   # resident weights
    vec_spec = pl.BlockSpec((1, F_pad), lambda i: (0, 0))       # folded BN shifts

    # Explicit VMEM budget (weights are block-index-invariant -> fetched once;
    # x/out tiles are double-buffered by the pipeline). Cap at 64 MiB so the
    # same setting is valid on v7x's smaller physical VMEM.
    w_bytes = 2 * F_pad * F_pad * jnp.dtype(w1.dtype).itemsize
    io_bytes = 2 * 2 * tn * F_pad * 4            # x + out, double-buffered
    vec_bytes = 2 * 2 * F_pad * 4
    tmp_bytes = 2 * tn * F_pad * 4               # f32 intermediates
    vmem_limit = int(min(64 * 1024 * 1024,
                         max(32 * 1024 * 1024,
                             2 * (w_bytes + io_bytes + vec_bytes + tmp_bytes))))

    out = pl.pallas_call(
        res_linear_block_kernel,
        out_shape=jax.ShapeDtypeStruct((N_pad, F_pad), x.dtype),
        grid_spec=pltpu.PrefetchScalarGridSpec(
            num_scalar_prefetch=0,
            grid=grid,
            in_specs=[row_spec, mat_spec, vec_spec, mat_spec, vec_spec],
            out_specs=row_spec,
        ),
        compiler_params=pltpu.CompilerParams(
            dimension_semantics=("parallel",),
            vmem_limit_bytes=vmem_limit),
    )(x, w1, t1, w2, t2)

    return out[:N, :F]


def fold_linear_bn(w, b, gamma, beta, running_mean, running_var, eps=1e-5,
                   weight_dtype=jnp.bfloat16):
    """Fold Linear(W, b) -> BatchNorm1d(eval) into a single (W', t').

    `w` is (F_in, F_out), i.e. the transpose of PyTorch's Linear.weight.
    y = (x @ W + b) * s + (beta - mean * s)  ==  x @ (W * s) + ((b - mean) * s + beta)
    """
    scale = gamma / jnp.sqrt(running_var + eps)            # (F_out,)
    w_folded = (w * scale[None, :]).astype(weight_dtype)
    shift = ((b - running_mean) * scale + beta).astype(jnp.float32)
    return w_folded, shift


def reference_forward(x, w1, t1, w2, t2):
    """Pure-JAX reference with the same dtypes as the kernel (bf16 matmul
    inputs, f32 accumulation) so results match tightly."""
    mm = w1.dtype
    h = jnp.dot(x.astype(mm), w1, preferred_element_type=jnp.float32) + t1.reshape(1, -1)
    h = jnp.maximum(h, 0.0)
    h = jnp.dot(h.astype(mm), w2, preferred_element_type=jnp.float32) + t2.reshape(1, -1)
    return jnp.maximum(h + x, 0.0)


if __name__ == "__main__":
    N, F = 32, 128  # small demo shapes: batch=32, in_features=128
    key = jax.random.PRNGKey(0)
    keys = jax.random.split(key, 12)

    x = jax.random.normal(keys[0], (N, F), dtype=jnp.float32)

    # Linear params, stored as (F_in, F_out) (transpose of PyTorch Linear.weight).
    w1 = jax.random.normal(keys[1], (F, F), dtype=jnp.float32) / jnp.sqrt(F)
    b1 = 0.1 * jax.random.normal(keys[2], (F,), dtype=jnp.float32)
    w2 = jax.random.normal(keys[3], (F, F), dtype=jnp.float32) / jnp.sqrt(F)
    b2 = 0.1 * jax.random.normal(keys[4], (F,), dtype=jnp.float32)

    # BatchNorm1d params + running stats (deterministic synthetic values).
    gamma1 = 1.0 + 0.1 * jax.random.normal(keys[5], (F,), dtype=jnp.float32)
    beta1 = 0.1 * jax.random.normal(keys[6], (F,), dtype=jnp.float32)
    rmean1 = 0.05 * jax.random.normal(keys[7], (F,), dtype=jnp.float32)
    rvar1 = 1.0 + 0.1 * jax.random.uniform(keys[8], (F,), dtype=jnp.float32)
    gamma2 = 1.0 + 0.1 * jax.random.normal(keys[9], (F,), dtype=jnp.float32)
    beta2 = 0.1 * jax.random.normal(keys[10], (F,), dtype=jnp.float32)
    rmean2 = jnp.zeros((F,), dtype=jnp.float32)
    rvar2 = 1.0 + 0.1 * jax.random.uniform(keys[11], (F,), dtype=jnp.float32)

    # Fold Linear bias + BatchNorm into (W', t') with bf16 weights.
    w1f, t1f = fold_linear_bn(w1, b1, gamma1, beta1, rmean1, rvar1)
    w2f, t2f = fold_linear_bn(w2, b2, gamma2, beta2, rmean2, rvar2)

    out = res_linear_block(x, w1f, t1f, w2f, t2f, tile_n=256)
    out = jax.block_until_ready(out)

    ref = reference_forward(x, w1f, t1f, w2f, t2f)
    assert out.shape == (N, F)
    max_diff = jnp.max(jnp.abs(out - ref))
    assert jnp.allclose(out, ref, atol=1e-2, rtol=1e-2), (
        f"mismatch vs JAX reference, max abs diff = {max_diff}")

    print("KERNEL_OK")
</pallas_src>

<mosaic_0001>
module attributes {stable_mosaic.version = 11 : i64} {
  func.func @res_linear_block_kernel(%arg0: i32, %arg1: memref<32x128xf32, #tpu.memory_space<vmem>>, %arg2: memref<128x128xbf16, #tpu.memory_space<vmem>>, %arg3: memref<1x128xf32, #tpu.memory_space<vmem>>, %arg4: memref<128x128xbf16, #tpu.memory_space<vmem>>, %arg5: memref<1x128xf32, #tpu.memory_space<vmem>>, %arg6: memref<32x128xf32, #tpu.memory_space<vmem>>) attributes {dimension_semantics = [#tpu.dimension_semantics<parallel>], iteration_bounds = array<i64: 1>, scalar_prefetch = 0 : i64, scratch_operands = 0 : i64, tpu.core_type = #tpu.core_type<tc>, window_params = [{transform_indices = @transform_0, window_bounds = array<i64: 32, 128>}, {pipeline_mode = #tpu.pipeline_mode<synchronous>, transform_indices = @transform_1, window_bounds = array<i64: 128, 128>}, {pipeline_mode = #tpu.pipeline_mode<synchronous>, transform_indices = @transform_2, window_bounds = array<i64: 1, 128>}, {pipeline_mode = #tpu.pipeline_mode<synchronous>, transform_indices = @transform_3, window_bounds = array<i64: 128, 128>}, {pipeline_mode = #tpu.pipeline_mode<synchronous>, transform_indices = @transform_4, window_bounds = array<i64: 1, 128>}, {transform_indices = @transform_5, window_bounds = array<i64: 32, 128>}]} {
    %c0 = arith.constant 0 : index
    %c0_0 = arith.constant 0 : index
    %0 = vector.load %arg1[%c0, %c0_0] : memref<32x128xf32, #tpu.memory_space<vmem>>, vector<32x128xf32>
    %c0_1 = arith.constant 0 : index
    %c0_2 = arith.constant 0 : index
    %1 = vector.load %arg1[%c0_1, %c0_2] : memref<32x128xf32, #tpu.memory_space<vmem>>, vector<32x128xf32>
    %2 = arith.truncf %1 : vector<32x128xf32> to vector<32x128xbf16>
    %c0_3 = arith.constant 0 : index
    %c0_4 = arith.constant 0 : index
    %3 = vector.load %arg2[%c0_3, %c0_4] : memref<128x128xbf16, #tpu.memory_space<vmem>>, vector<128x128xbf16>
    %cst = arith.constant dense<0.000000e+00> : vector<32x128xf32>
    %4 = tpu.matmul %2, %3, %cst {dimension_numbers = #tpu.dot_dimension_numbers<[1], [0], [0], [1], [0, 0, 1, 1], [], []>} : vector<32x128xbf16>, vector<128x128xbf16>, vector<32x128xf32> -> vector<32x128xf32>
    %c0_5 = arith.constant 0 : index
    %c0_6 = arith.constant 0 : index
    %5 = vector.load %arg3[%c0_5, %c0_6] : memref<1x128xf32, #tpu.memory_space<vmem>>, vector<1x128xf32>
    %6 = vector.broadcast %5 : vector<1x128xf32> to vector<32x128xf32>
    %7 = arith.addf %4, %6 : vector<32x128xf32>
    %cst_7 = arith.constant 0.000000e+00 : f32
    %8 = vector.broadcast %cst_7 : f32 to vector<32x128xf32>
    %9 = arith.maximumf %7, %8 : vector<32x128xf32>
    %10 = arith.truncf %9 : vector<32x128xf32> to vector<32x128xbf16>
    %c0_8 = arith.constant 0 : index
    %c0_9 = arith.constant 0 : index
    %11 = vector.load %arg4[%c0_8, %c0_9] : memref<128x128xbf16, #tpu.memory_space<vmem>>, vector<128x128xbf16>
    %cst_10 = arith.constant dense<0.000000e+00> : vector<32x128xf32>
    %12 = tpu.matmul %10, %11, %cst_10 {dimension_numbers = #tpu.dot_dimension_numbers<[1], [0], [0], [1], [0, 0, 1, 1], [], []>} : vector<32x128xbf16>, vector<128x128xbf16>, vector<32x128xf32> -> vector<32x128xf32>
    %c0_11 = arith.constant 0 : index
    %c0_12 = arith.constant 0 : index
    %13 = vector.load %arg5[%c0_11, %c0_12] : memref<1x128xf32, #tpu.memory_space<vmem>>, vector<1x128xf32>
    %14 = vector.broadcast %13 : vector<1x128xf32> to vector<32x128xf32>
    %15 = arith.addf %12, %14 : vector<32x128xf32>
    %16 = arith.addf %15, %0 : vector<32x128xf32>
    %cst_13 = arith.constant 0.000000e+00 : f32
    %17 = vector.broadcast %cst_13 : f32 to vector<32x128xf32>
    %18 = arith.maximumf %16, %17 : vector<32x128xf32>
    %c0_14 = arith.constant 0 : index
    %c0_15 = arith.constant 0 : index
    %19 = vector.load %arg6[%c0_14, %c0_15] : memref<32x128xf32, #tpu.memory_space<vmem>>, vector<32x128xf32>
    tpu.vector_store %arg6[%c0_14, %c0_15], %18 {strides = array<i32>} : memref<32x128xf32, #tpu.memory_space<vmem>>, vector<32x128xf32>,
    return
  }
  func.func @transform_0(%arg0: i32) -> (i32, i32) {
    %c0_i32 = arith.constant 0 : i32
    %c0_i32_0 = arith.constant 0 : i32
    return %arg0, %c0_i32 : i32, i32
  }
  func.func @transform_1(%arg0: i32) -> (i32, i32) {
    %c0_i32 = arith.constant 0 : i32
    %c0_i32_0 = arith.constant 0 : i32
    %c0_i32_1 = arith.constant 0 : i32
    return %c0_i32, %c0_i32_0 : i32, i32
  }
  func.func @transform_2(%arg0: i32) -> (i32, i32) {
    %c0_i32 = arith.constant 0 : i32
    %c0_i32_0 = arith.constant 0 : i32
    %c0_i32_1 = arith.constant 0 : i32
    return %c0_i32, %c0_i32_0 : i32, i32
  }
  func.func @transform_3(%arg0: i32) -> (i32, i32) {
    %c0_i32 = arith.constant 0 : i32
    %c0_i32_0 = arith.constant 0 : i32
    %c0_i32_1 = arith.constant 0 : i32
    return %c0_i32, %c0_i32_0 : i32, i32
  }
  func.func @transform_4(%arg0: i32) -> (i32, i32) {
    %c0_i32 = arith.constant 0 : i32
    %c0_i32_0 = arith.constant 0 : i32
    %c0_i32_1 = arith.constant 0 : i32
    return %c0_i32, %c0_i32_0 : i32, i32
  }
  func.func @transform_5(%arg0: i32) -> (i32, i32) {
    %c0_i32 = arith.constant 0 : i32
    %c0_i32_0 = arith.constant 0 : i32
    return %arg0, %c0_i32 : i32, i32
  }
}

</mosaic_0001>

<llo_original>
// kernel: tpu_custom_call.1
$region0: #{tpu_custom_call.1}
  #allocation0 [shape = 'u32[]', space=smem, size = 0x4, offset = 0x4, fixed_abs, tag = 'smem constant byte address 0x4 - core index']
  #allocation1 [shape = 'u32[144,128]{1,0:T(1,128)}', space=vmem, size = 0x12000, scoped, tag = 'internal scratch']
  %s0 = inlined_call_operand.hbm [shape: f32[32,128], index: 0, kind: input, shape index: {}]
  %s1 = inlined_call_operand.hbm [shape: bf16[128,128], index: 1, kind: input, shape index: {}]
  %s2 = inlined_call_operand.vmem [shape: f32[1,128], index: 2, kind: input, shape index: {}]
  %s3 = inlined_call_operand.hbm [shape: bf16[128,128], index: 3, kind: input, shape index: {}]
  %s4 = inlined_call_operand.vmem [shape: f32[1,128], index: 4, kind: input, shape index: {}]
  %s5 = inlined_call_operand.hbm [shape: f32[32,128], index: 5, kind: output, shape index: {}]
  %s6 = sld [smem:[#allocation0]]
  $region42: #{tpu_custom_call.1} parent=0
    _
  %s8 = ssub.s32 1, %s6
  %s9 = scalar_select 0, %s8, %s6
  $region1: #{tpu_custom_call.1} parent=0
    #allocation2 [shape = 'u8[16384]{0}', space=vmem, size = 0x4000, scoped, tag = 'input window, operand 0, single buffered']
    #allocation3 [shape = 's32[1]{0}', space=sflag, size = 0x4, scoped, tag = 'scoped memory for tpu_custom_call.1']
    #allocation4 [shape = 's32[1]{0}', space=sflag, size = 0x4, scoped, tag = 'scoped memory for tpu_custom_call.1']
    #allocation5 [shape = 'u8[32768]{0}', space=vmem, size = 0x8000, scoped, tag = 'input window, operand 1, single buffered']
    #allocation6 [shape = 's32[1]{0}', space=sflag, size = 0x4, scoped, tag = 'scoped memory for tpu_custom_call.1']
    #allocation7 [shape = 'u8[32768]{0}', space=vmem, size = 0x8000, scoped, tag = 'input window, operand 3, single buffered']
    #allocation8 [shape = 'u8[16384]{0}', space=vmem, size = 0x4000, scoped, tag = 'output window, operand 0, single buffered']
    %10 = vsyncpa [#allocation3], 0
    %11 = vsyncpa [#allocation6], 0
    %12 = vsyncpa [#allocation4], 0
    // Predicated region
    $region2: #{tpu_custom_call.1} parent=1 // pred_check
      _
    $region3: #{tpu_custom_call.1} parent=1 // pred_check_branch
      %14 = sbr.rel (0) target = $region5
    $region4: #{tpu_custom_call.1} parent=1 // pred_region
      %s16 = ssub.s32 512, 512
      %17 = vsyncadd [#allocation3], %s16
      %s18 = sshll.u32 [#allocation2], 4
      %s19 = int_to_ptr.vmem [resolvable:$true] %s18
      %24 = dma.hbm_to_vmem [thread:$0]  %s0, 512, %s19, [#allocation3], 128, 128, 8
    $region5: #{tpu_custom_call.1} parent=1 // pred_fallthru
      _
    // Predicated region
    $region6: #{tpu_custom_call.1} parent=1 // pred_check
      _
    $region7: #{tpu_custom_call.1} parent=1 // pred_check_branch
      %26 = sbr.rel (0) target = $region9
    $region8: #{tpu_custom_call.1} parent=1 // pred_region
      %s28 = ssub.s32 1024, 1024
      %29 = vsyncadd [#allocation6], %s28
      %s30 = sshll.u32 [#allocation5], 4
      %s31 = int_to_ptr.vmem [resolvable:$true] %s30
      %36 = dma.hbm_to_vmem [thread:$0]  %s1, 1024, %s31, [#allocation6], 64, 64, 4
    $region9: #{tpu_custom_call.1} parent=1 // pred_fallthru
      _
    // Predicated region
    $region10: #{tpu_custom_call.1} parent=1 // pred_check
      _
    $region11: #{tpu_custom_call.1} parent=1 // pred_check_branch
      %38 = sbr.rel (0) target = $region13
    $region12: #{tpu_custom_call.1} parent=1 // pred_region
      _
    $region13: #{tpu_custom_call.1} parent=1 // pred_fallthru
      _
    // Predicated region
    $region14: #{tpu_custom_call.1} parent=1 // pred_check
      _
    $region15: #{tpu_custom_call.1} parent=1 // pred_check_branch
      %40 = sbr.rel (0) target = $region17
    $region16: #{tpu_custom_call.1} parent=1 // pred_region
      %s42 = ssub.s32 1024, 1024
      %43 = vsyncadd [#allocation6], %s42
      %s44 = sshll.u32 [#allocation7], 4
      %s45 = int_to_ptr.vmem [resolvable:$true] %s44
      %50 = dma.hbm_to_vmem [thread:$0]  %s3, 1024, %s45, [#allocation6], 64, 64, 4
    $region17: #{tpu_custom_call.1} parent=1 // pred_fallthru
      _
    // Predicated region
    $region18: #{tpu_custom_call.1} parent=1 // pred_check
      _
    $region19: #{tpu_custom_call.1} parent=1 // pred_check_branch
      %52 = sbr.rel (0) target = $region21
    $region20: #{tpu_custom_call.1} parent=1 // pred_region
      _
    $region21: #{tpu_custom_call.1} parent=1 // pred_fallthru
      _
    // Predicated region
    $region22: #{tpu_custom_call.1} parent=1 // pred_check
      _
    $region23: #{tpu_custom_call.1} parent=1 // pred_check_branch
      %54 = sbr.rel (0) target = $region25
    $region24: #{tpu_custom_call.1} parent=1 // pred_region
      %55 = dma.done [#allocation3], 512
    $region25: #{tpu_custom_call.1} parent=1 // pred_fallthru
      _
    // Predicated region
    $region26: #{tpu_custom_call.1} parent=1 // pred_check
      _
    $region27: #{tpu_custom_call.1} parent=1 // pred_check_branch
      %57 = sbr.rel (0) target = $region29
    $region28: #{tpu_custom_call.1} parent=1 // pred_region
      %58 = dma.done [#allocation6], 1024
    $region29: #{tpu_custom_call.1} parent=1 // pred_fallthru
      _
    // Predicated region
    $region30: #{tpu_custom_call.1} parent=1 // pred_check
      _
    $region31: #{tpu_custom_call.1} parent=1 // pred_check_branch
      %60 = sbr.rel (0) target = $region33
    $region32: #{tpu_custom_call.1} parent=1 // pred_region
      %61 = dma.done [#allocation6], 1024
    $region33: #{tpu_custom_call.1} parent=1 // pred_fallthru
      _
    %v63 = vld [vmem:[#allocation2] sm:$0xff]
    %v64 = vld [vmem:[#allocation2 + $0x8] sm:$0xff]
    %v65 = vld [vmem:[#allocation2 + $0x10] sm:$0xff]
    %v66 = vld [vmem:[#allocation2 + $0x18] sm:$0xff]
    %v67 = vpack.c.bf16 %v64, %v63
    %v68 = vpack.c.bf16 %v66, %v65
    %v69 = vld [vmem:[#allocation5] sm:$0xf]
    %v70 = vld [vmem:[#allocation5 + $0x4] sm:$0xf]
    %v71 = vld [vmem:[#allocation5 + $0x8] sm:$0xf]
    %v72 = vld [vmem:[#allocation5 + $0xc] sm:$0xf]
    %v73 = vld [vmem:[#allocation5 + $0x10] sm:$0xf]
    %v74 = vld [vmem:[#allocation5 + $0x14] sm:$0xf]
    %v75 = vld [vmem:[#allocation5 + $0x18] sm:$0xf]
    %v76 = vld [vmem:[#allocation5 + $0x1c] sm:$0xf]
    %v77 = vld [vmem:[#allocation5 + $0x20] sm:$0xf]
    %v78 = vld [vmem:[#allocation5 + $0x24] sm:$0xf]
    %v79 = vld [vmem:[#allocation5 + $0x28] sm:$0xf]
    %v80 = vld [vmem:[#allocation5 + $0x2c] sm:$0xf]
    %v81 = vld [vmem:[#allocation5 + $0x30] sm:$0xf]
    %v82 = vld [vmem:[#allocation5 + $0x34] sm:$0xf]
    %v83 = vld [vmem:[#allocation5 + $0x38] sm:$0xf]
    %v84 = vld [vmem:[#allocation5 + $0x3c] sm:$0xf]
    %v85 = vld [vmem:[%s2] sm:$0x1]
    %v87 = vlaneseq
    %v88 = vshrl.u32 %v87, 7
    %v89 = vsub.s32 0, %v88
    %v90 = vrot.slane %v85, %v89
    %v108 = vunpack.c.l.b16 %v69
    %v109 = vunpack.c.l.b16 %v70
    %v110 = vunpack.c.l.b16 %v71
    %v111 = vunpack.c.l.b16 %v72
    %v112 = vunpack.c.l.b16 %v73
    %v113 = vunpack.c.l.b16 %v74
    %v114 = vunpack.c.l.b16 %v75
    %v115 = vunpack.c.l.b16 %v76
    %v116 = vunpack.c.l.b16 %v77
    %v117 = vunpack.c.l.b16 %v78
    %v118 = vunpack.c.l.b16 %v79
    %v119 = vunpack.c.l.b16 %v80
    %v120 = vunpack.c.l.b16 %v81
    %v121 = vunpack.c.l.b16 %v82
    %v122 = vunpack.c.l.b16 %v83
    %v123 = vunpack.c.l.b16 %v84
    %v124 = vpack.c.b16 %v109, %v108
    %v125 = vpack.c.b16 %v111, %v110
    %v126 = vpack.c.b16 %v113, %v112
    %v127 = vpack.c.b16 %v115, %v114
    %v128 = vpack.c.b16 %v117, %v116
    %v129 = vpack.c.b16 %v119, %v118
    %v130 = vpack.c.b16 %v121, %v120
    %v131 = vpack.c.b16 %v123, %v122
    %140 = vmatprep.subr.bf16.mxu0 0
    %141 = vmatpush1.bf16.msra.mxu0 %v124
    %142 = vmatprep.subr.bf16.mxu0 0
    %143 = vmatpush1.bf16.msra.mxu0 %v125
    %144 = vmatprep.subr.bf16.mxu0 0
    %145 = vmatpush1.bf16.msra.mxu0 %v126
    %146 = vmatprep.subr.bf16.mxu0 0
    %147 = vmatpush1.bf16.msra.mxu0 %v127
    %148 = vmatprep.subr.bf16.mxu0 0
    %149 = vmatpush1.bf16.msra.mxu0 %v128
    %150 = vmatprep.subr.bf16.mxu0 0
    %151 = vmatpush1.bf16.msra.mxu0 %v129
    %152 = vmatprep.subr.bf16.mxu0 0
    %153 = vmatpush1.bf16.msra.mxu0 %v130
    %154 = vmatprep.subr.bf16.mxu0 0
    %155 = vmatpush1.bf16.msra.mxu0 %v131
    %156 = vmatprep.subr.bf16.mxu0 0
    %157 = vmatpush1.bf16.msra.mxu0 0
    %158 = vmatprep.subr.bf16.mxu0 0
    %159 = vmatpush1.bf16.msra.mxu0 0
    %160 = vmatprep.subr.bf16.mxu0 0
    %161 = vmatpush1.bf16.msra.mxu0 0
    %162 = vmatprep.subr.bf16.mxu0 0
    %163 = vmatpush1.bf16.msra.mxu0 0
    %164 = vmatprep.subr.bf16.mxu0 0
    %165 = vmatpush1.bf16.msra.mxu0 0
    %166 = vmatprep.subr.bf16.mxu0 0
    %167 = vmatpush1.bf16.msra.mxu0 0
    %168 = vmatprep.subr.bf16.mxu0 0
    %169 = vmatpush1.bf16.msra.mxu0 0
    %170 = vmatprep.subr.bf16.mxu0 0
    %171 = vmatpush1.bf16.msra.mxu0 0
    %172 = vmatprep.mubr.bf16.mxu0 0
    %173 = vmatmul.mubr.bf16.gmra.mrb[0].mxu0 %v67
    %v174 = vpop.f32.mrb[0].mxu0
    %v175 = vadd.f32 %v90, %v174
    %v176 = vpop.f32.mrb[0].mxu0
    %v177 = vpop.f32.mrb[0].mxu0
    %v178 = vadd.f32 %v90, %v177
    %v179 = vpop.f32.mrb[0].mxu0
    %180 = vmatprep.mubr.bf16.mxu0 0
    %181 = vmatmul.mubr.bf16.gmra.mrb[0].mxu0 %v68
    %v182 = vpop.f32.mrb[0].mxu0
    %v183 = vadd.f32 %v90, %v182
    %v184 = vpop.f32.mrb[0].mxu0
    %v185 = vpop.f32.mrb[0].mxu0
    %v186 = vadd.f32 %v90, %v185
    %v187 = vpop.f32.mrb[0].mxu0
    %188 = vdwg.mxu0
    %v189 = vmax.f32 %v175, 0.0
    %v190 = vmax.f32 %v178, 0.0
    %v191 = vmax.f32 %v183, 0.0
    %v192 = vmax.f32 %v186, 0.0
    %v193 = vpack.c.bf16 %v190, %v189
    %v194 = vpack.c.bf16 %v192, %v191
    %v195 = vld [vmem:[#allocation7] sm:$0xf]
    %v196 = vld [vmem:[#allocation7 + $0x4] sm:$0xf]
    %v197 = vld [vmem:[#allocation7 + $0x8] sm:$0xf]
    %v198 = vld [vmem:[#allocation7 + $0xc] sm:$0xf]
    %v199 = vld [vmem:[#allocation7 + $0x10] sm:$0xf]
    %v200 = vld [vmem:[#allocation7 + $0x14] sm:$0xf]
    %v201 = vld [vmem:[#allocation7 + $0x18] sm:$0xf]
    %v202 = vld [vmem:[#allocation7 + $0x1c] sm:$0xf]
    %v203 = vld [vmem:[#allocation7 + $0x20] sm:$0xf]
    %v204 = vld [vmem:[#allocation7 + $0x24] sm:$0xf]
    %v205 = vld [vmem:[#allocation7 + $0x28] sm:$0xf]
    %v206 = vld [vmem:[#allocation7 + $0x2c] sm:$0xf]
    %v207 = vld [vmem:[#allocation7 + $0x30] sm:$0xf]
    %v208 = vld [vmem:[#allocation7 + $0x34] sm:$0xf]
    %v209 = vld [vmem:[#allocation7 + $0x38] sm:$0xf]
    %v210 = vld [vmem:[#allocation7 + $0x3c] sm:$0xf]
    %v211 = vld [vmem:[%s4] sm:$0x1]
    %v213 = vlaneseq
    %v214 = vshrl.u32 %v213, 7
    %v215 = vsub.s32 0, %v214
    %v216 = vrot.slane %v211, %v215
    %v234 = vunpack.c.l.b16 %v195
    %v235 = vunpack.c.l.b16 %v196
    %v236 = vunpack.c.l.b16 %v197
    %v237 = vunpack.c.l.b16 %v198
    %v238 = vunpack.c.l.b16 %v199
    %v239 = vunpack.c.l.b16 %v200
    %v240 = vunpack.c.l.b16 %v201
    %v241 = vunpack.c.l.b16 %v202
    %v242 = vunpack.c.l.b16 %v203
    %v243 = vunpack.c.l.b16 %v204
    %v244 = vunpack.c.l.b16 %v205
    %v245 = vunpack.c.l.b16 %v206
    %v246 = vunpack.c.l.b16 %v207
    %v247 = vunpack.c.l.b16 %v208
    %v248 = vunpack.c.l.b16 %v209
    %v249 = vunpack.c.l.b16 %v210
    %v250 = vpack.c.b16 %v235, %v234
    %v251 = vpack.c.b16 %v237, %v236
    %v252 = vpack.c.b16 %v239, %v238
    %v253 = vpack.c.b16 %v241, %v240
    %v254 = vpack.c.b16 %v243, %v242
    %v255 = vpack.c.b16 %v245, %v244
    %v256 = vpack.c.b16 %v247, %v246
    %v257 = vpack.c.b16 %v249, %v248
    %266 = vmatprep.subr.bf16.mxu0 0
    %267 = vmatpush1.bf16.msra.mxu0 %v250
    %268 = vmatprep.subr.bf16.mxu0 0
    %269 = vmatpush1.bf16.msra.mxu0 %v251
    %270 = vmatprep.subr.bf16.mxu0 0
    %271 = vmatpush1.bf16.msra.mxu0 %v252
    %272 = vmatprep.subr.bf16.mxu0 0
    %273 = vmatpush1.bf16.msra.mxu0 %v253
    %274 = vmatprep.subr.bf16.mxu0 0
    %275 = vmatpush1.bf16.msra.mxu0 %v254
    %276 = vmatprep.subr.bf16.mxu0 0
    %277 = vmatpush1.bf16.msra.mxu0 %v255
    %278 = vmatprep.subr.bf16.mxu0 0
    %279 = vmatpush1.bf16.msra.mxu0 %v256
    %280 = vmatprep.subr.bf16.mxu0 0
    %281 = vmatpush1.bf16.msra.mxu0 %v257
    %282 = vmatprep.subr.bf16.mxu0 0
    %283 = vmatpush1.bf16.msra.mxu0 0
    %284 = vmatprep.subr.bf16.mxu0 0
    %285 = vmatpush1.bf16.msra.mxu0 0
    %286 = vmatprep.subr.bf16.mxu0 0
    %287 = vmatpush1.bf16.msra.mxu0 0
    %288 = vmatprep.subr.bf16.mxu0 0
    %289 = vmatpush1.bf16.msra.mxu0 0
    %290 = vmatprep.subr.bf16.mxu0 0
    %291 = vmatpush1.bf16.msra.mxu0 0
    %292 = vmatprep.subr.bf16.mxu0 0
    %293 = vmatpush1.bf16.msra.mxu0 0
    %294 = vmatprep.subr.bf16.mxu0 0
    %295 = vmatpush1.bf16.msra.mxu0 0
    %296 = vmatprep.subr.bf16.mxu0 0
    %297 = vmatpush1.bf16.msra.mxu0 0
    %298 = vmatprep.mubr.bf16.mxu0 0
    %299 = vmatmul.mubr.bf16.gmra.mrb[0].mxu0 %v193
    %v300 = vpop.f32.mrb[0].mxu0
    %v301 = vadd.f32 %v216, %v300
    %v302 = vpop.f32.mrb[0].mxu0
    %v303 = vpop.f32.mrb[0].mxu0
    %v304 = vadd.f32 %v216, %v303
    %v305 = vpop.f32.mrb[0].mxu0
    %306 = vmatprep.mubr.bf16.mxu0 0
    %307 = vmatmul.mubr.bf16.gmra.mrb[0].mxu0 %v194
    %v308 = vpop.f32.mrb[0].mxu0
    %v309 = vadd.f32 %v216, %v308
    %v310 = vpop.f32.mrb[0].mxu0
    %v311 = vpop.f32.mrb[0].mxu0
    %v312 = vadd.f32 %v216, %v311
    %v313 = vpop.f32.mrb[0].mxu0
    %314 = vdwg.mxu0
    %v315 = vadd.f32 %v301, %v63
    %v316 = vadd.f32 %v304, %v64
    %v317 = vadd.f32 %v309, %v65
    %v318 = vadd.f32 %v312, %v66
    %v319 = vmax.f32 %v315, 0.0
    %v320 = vmax.f32 %v316, 0.0
    %v321 = vmax.f32 %v317, 0.0
    %v322 = vmax.f32 %v318, 0.0
    %323 = vst [vmem:[#allocation8] sm:$0xff] %v319
    %324 = vst [vmem:[#allocation8 + $0x8] sm:$0xff] %v320
    %325 = vst [vmem:[#allocation8 + $0x10] sm:$0xff] %v321
    %326 = vst [vmem:[#allocation8 + $0x18] sm:$0xff] %v322
    // Predicated region
    $region34: #{tpu_custom_call.1} parent=1 // pred_check
      _
    $region35: #{tpu_custom_call.1} parent=1 // pred_check_branch
      %328 = sbr.rel (0) target = $region37
    $region36: #{tpu_custom_call.1} parent=1 // pred_region
      %s330 = ssub.s32 512, 512
      %331 = vsyncadd [#allocation4], %s330
      %s332 = sshll.u32 [#allocation8], 4
      %s333 = int_to_ptr.vmem [resolvable:$true] %s332
      %338 = dma.vmem_to_hbm [thread:$0]  %s333, 512, %s5, [#allocation4], 128, 128, 8
    $region37: #{tpu_custom_call.1} parent=1 // pred_fallthru
      _
    // Predicated region
    $region38: #{tpu_custom_call.1} parent=1 // pred_check
      _
    $region39: #{tpu_custom_call.1} parent=1 // pred_check_branch
      %340 = sbr.rel (0) target = $region41
    $region40: #{tpu_custom_call.1} parent=1 // pred_region
      %341 = dma.done [#allocation4], 512
    $region41: #{tpu_custom_call.1} parent=1 // pred_fallthru
      _
    %342 = vsyncpa [#allocation3], 1
    %343 = vsyncpa [#allocation6], 1
    %344 = vsyncpa [#allocation4], 1

</llo_original>
